<compile_context>
chip_gen: v6e
topology: v6e:2x2x1
jax: 0.10.0
libtpu: 0.0.40
codegen_flags: <defaults>
</compile_context>

<pallas_src>
import functools

import jax
import jax.numpy as jnp
from jax.experimental import pallas as pl
from jax.experimental.pallas import tpu as pltpu

INPUT_DIM = 3
HIDDEN_DIM = 32
NUM_CLASSES = 5
THRESHOLD = 0.85   # module-level `threshold` in the reference script
STEP = 5

# Row layout of the packed bf16 weight slab (lanes = 4*HIDDEN_DIM = 128).
# 16-row alignment keeps the w_hh / w_fc slices on bf16 (16, 128) tile boundaries.
W_ROW_IH = 0                        # rows [0, INPUT_DIM)   : W_ih^T  (in, 4H)
W_ROW_HH = 16                       # rows [16, 16+H)       : W_hh^T  (H, 4H)
W_ROW_FC = W_ROW_HH + HIDDEN_DIM    # rows [48, 48+H)       : W_fc^T  (H, C), lane-padded
W_ROWS = W_ROW_FC + HIDDEN_DIM      # 80
NEG_MASK = -1e30                    # logit mask for padded class lanes


# ----------------------------------------------------------------------------
# Pallas kernel: whole forward (LSTM recurrence, FC, softmax-max, threshold).
# ----------------------------------------------------------------------------
def _cot_early_tsc_kernel(x_ref, w_ref, b_ref, out_ref, *,
                          step, hidden, threshold, bpad):
    H = hidden
    in_dim = x_ref.shape[1]

    wih = w_ref[W_ROW_IH:W_ROW_IH + in_dim, :]      # (in, 4H) bf16, gate cols [i|f|o|g]
    whh = w_ref[W_ROW_HH:W_ROW_HH + H, :]           # (H, 4H)  bf16
    wfc = w_ref[W_ROW_FC:W_ROW_FC + H, :]           # (H, 4H)  bf16, lanes >= C are zero
    b_gate = b_ref[0:1, :]                          # (1, 4H)  f32
    b_fc = b_ref[1:2, :]                            # (1, 4H)  f32, lanes >= C are -1e30

    # ---- ONE input-projection dot for ALL timesteps (off the serial h-chain) ----
    xw = jnp.dot(x_ref[...], wih,
                 preferred_element_type=jnp.float32) + b_gate      # (step*bpad, 4H)

    def cell(gates, c):
        sig = jax.nn.sigmoid(gates[:, :3 * H])      # i|f|o : one 96-lane EUP pass
        g_g = jnp.tanh(gates[:, 3 * H:])            # g     : one 32-lane EUP pass
        i_g = sig[:, 0 * H:1 * H]
        f_g = sig[:, 1 * H:2 * H]
        o_g = sig[:, 2 * H:3 * H]
        c_new = f_g * c + i_g * g_g
        return o_g * jnp.tanh(c_new), c_new

    # t = 0: h == 0, so the recurrent matmul is exactly zero -> skip it.
    h, c = cell(xw[0:bpad, :], jnp.zeros((bpad, H), jnp.float32))

    # ---- recurrence: one fused bf16 128-lane MXU dot per timestep ----------------
    for t in range(1, step):
        rec = jnp.dot(h.astype(jnp.bfloat16), whh,
                      preferred_element_type=jnp.float32)           # (bpad, 4H)
        h, c = cell(xw[t * bpad:(t + 1) * bpad, :] + rec, c)

    # ---- classifier head: padded class lanes carry -1e30 via b_fc ----------------
    logits = jnp.dot(h.astype(jnp.bfloat16), wfc,
                     preferred_element_type=jnp.float32) + b_fc     # (bpad, 4H)

    # conf = max softmax prob = 1 / sum(exp(logits - max)); exact divide so the
    # threshold comparison is faithful.  preds = first argmax on logits (equivalent
    # to argmax on probs; reproduces torch.max's first-index rule).
    m = jnp.max(logits, axis=1, keepdims=True)
    denom = jnp.sum(jnp.exp(logits - m), axis=1, keepdims=True)
    conf = jnp.float32(1.0) / denom                                  # (bpad, 1)

    col = jax.lax.broadcasted_iota(jnp.int32, logits.shape, 1)
    preds = jnp.min(jnp.where(logits == m, col, jnp.int32(logits.shape[1])),
                    axis=1, keepdims=True)                           # (bpad, 1)
    early = (conf >= jnp.float32(threshold)).astype(jnp.float32)     # (bpad, 1)

    # ---- single full-tile output slab: lane0=conf, lane1=preds, lane2=early ------
    lane = jax.lax.broadcasted_iota(jnp.int32, out_ref.shape, 1)
    slab = jnp.where(lane == 0, conf, jnp.float32(0.0))
    slab = jnp.where(lane == 1, preds.astype(jnp.float32), slab)
    slab = jnp.where(lane == 2, early, slab)
    out_ref[...] = slab


# ----------------------------------------------------------------------------
# One-time weight prep (kept OUT of the per-call hot path).
# ----------------------------------------------------------------------------
def prepare_params(params):
    H = HIDDEN_DIM
    in_dim = params["w_ih"].shape[1]
    C = params["w_fc"].shape[0]
    assert in_dim <= W_ROW_HH

    # PyTorch LSTM gate-row order is [i; f; g; o]; reorder to [i; f; o; g] so the
    # kernel applies sigmoid to one contiguous 3H slice and tanh to the last H.
    perm = jnp.concatenate([jnp.arange(0, H), jnp.arange(H, 2 * H),
                            jnp.arange(3 * H, 4 * H), jnp.arange(2 * H, 3 * H)])
    w_ih = jnp.asarray(params["w_ih"], jnp.float32)[perm].T          # (in, 4H)
    w_hh = jnp.asarray(params["w_hh"], jnp.float32)[perm].T          # (H, 4H)
    b = (jnp.asarray(params["b_ih"], jnp.float32)
         + jnp.asarray(params["b_hh"], jnp.float32))[perm]           # (4H,)
    w_fc = jnp.asarray(params["w_fc"], jnp.float32).T                # (H, C)

    # One bf16 weight slab holding every matmul operand (rows 16-aligned).
    w_slab = jnp.zeros((W_ROWS, 4 * H), jnp.float32)
    w_slab = w_slab.at[W_ROW_IH:W_ROW_IH + in_dim, :].set(w_ih)
    w_slab = w_slab.at[W_ROW_HH:W_ROW_HH + H, :].set(w_hh)
    w_slab = w_slab.at[W_ROW_FC:W_ROW_FC + H, :C].set(w_fc)
    w_slab = w_slab.astype(jnp.bfloat16)

    # One f32 bias slab: row0 = fused gate bias, row1 = FC bias with -1e30 padding
    # so the unused 123 logit lanes can never win the max / contribute to softmax.
    b_fc_row = jnp.full((4 * H,), NEG_MASK, jnp.float32)
    b_fc_row = b_fc_row.at[:C].set(jnp.asarray(params["b_fc"], jnp.float32))
    b_slab = jnp.zeros((8, 4 * H), jnp.float32)
    b_slab = b_slab.at[0, :].set(b)
    b_slab = b_slab.at[1, :].set(b_fc_row)

    return {"w": w_slab, "b": b_slab}


# ----------------------------------------------------------------------------
# Jitted forward: slice/flatten x, one pallas_call, trivial unpacking.
# ----------------------------------------------------------------------------
@functools.partial(jax.jit, static_argnames=("step", "threshold"))
def cot_early_tsc_forward(x, prepped, step=STEP, threshold=THRESHOLD):
    batch, _, in_dim = x.shape
    bpad = max(8, -(-batch // 8) * 8)

    # Only the first `step` of 20 timesteps are used: slice BEFORE the call so the
    # kernel never DMAs dead timesteps; flatten time into rows (t-major) and pad the
    # batch to a sublane multiple so the input projection is one dense dot and the
    # per-step slices are 8-aligned.  bf16 halves the x DMA (matmuls accumulate f32).
    xs = jnp.transpose(x[:, :step, :].astype(jnp.float32), (1, 0, 2))   # (step, B, in)
    xs = jnp.pad(xs, ((0, 0), (0, bpad - batch), (0, 0)))
    x_flat = xs.reshape(step * bpad, in_dim).astype(jnp.bfloat16)

    kernel = functools.partial(_cot_early_tsc_kernel, step=step, hidden=HIDDEN_DIM,
                               threshold=float(threshold), bpad=bpad)
    vmem = pl.BlockSpec(memory_space=pltpu.MemorySpace.VMEM)
    # Grid-less (whole problem resident in VMEM) — right call at this size.
    # TODO(synk): for large batch, add a leading batch grid axis with
    # dimension_semantics=("parallel",), constant index_maps for the two param slabs,
    # 128-row (v5e) / 256-row (v6e, v7x) batch tiles, budgeted against v7x's 64 MiB VMEM.
    slab = pl.pallas_call(
        kernel,
        out_shape=jax.ShapeDtypeStruct((bpad, 4 * HIDDEN_DIM), jnp.float32),
        in_specs=[vmem, vmem, vmem],
        out_specs=vmem,
    )(x_flat, prepped["w"], prepped["b"])

    conf = slab[:batch, 0]
    preds = slab[:batch, 1].astype(jnp.int32)
    early = slab[:batch, 2] > jnp.float32(0.5)
    return preds, conf, early


# ----------------------------------------------------------------------------
# Deterministic parameter init (PyTorch-style uniform(-1/sqrt(H), 1/sqrt(H))).
# ----------------------------------------------------------------------------
def init_params(key, input_dim=INPUT_DIM, hidden_dim=HIDDEN_DIM,
                num_classes=NUM_CLASSES):
    k = 1.0 / jnp.sqrt(jnp.float32(hidden_dim))
    ks = jax.random.split(key, 6)
    u = lambda kk, shape: jax.random.uniform(kk, shape, jnp.float32, -k, k)
    return {
        "w_ih": u(ks[0], (4 * hidden_dim, input_dim)),
        "w_hh": u(ks[1], (4 * hidden_dim, hidden_dim)),
        "b_ih": u(ks[2], (4 * hidden_dim,)),
        "b_hh": u(ks[3], (4 * hidden_dim,)),
        "w_fc": u(ks[4], (num_classes, hidden_dim)),
        "b_fc": u(ks[5], (num_classes,)),
    }


# ----------------------------------------------------------------------------
# Pure-JAX fp32 reference (mirrors the PyTorch forward op-for-op).
# ----------------------------------------------------------------------------
def reference_forward(x, params, step=STEP, threshold=THRESHOLD):
    batch = x.shape[0]
    H = HIDDEN_DIM
    w_ih, w_hh = params["w_ih"], params["w_hh"]
    b = params["b_ih"] + params["b_hh"]
    h = jnp.zeros((batch, H), jnp.float32)
    c = jnp.zeros((batch, H), jnp.float32)
    for t in range(step):
        xt = x[:, t, :].astype(jnp.float32)
        gates = xt @ w_ih.T + h @ w_hh.T + b
        i_g = jax.nn.sigmoid(gates[:, 0 * H:1 * H])
        f_g = jax.nn.sigmoid(gates[:, 1 * H:2 * H])
        g_g = jnp.tanh(gates[:, 2 * H:3 * H])
        o_g = jax.nn.sigmoid(gates[:, 3 * H:4 * H])
        c = f_g * c + i_g * g_g
        h = o_g * jnp.tanh(c)
    logits = h @ params["w_fc"].T + params["b_fc"]
    probs = jax.nn.softmax(logits, axis=1)
    conf = jnp.max(probs, axis=1)
    preds = jnp.argmax(probs, axis=1).astype(jnp.int32)
    early = conf >= threshold
    return preds, conf, early


# ----------------------------------------------------------------------------
# Pure-JAX mirror of the kernel's numerics (bf16 matmul operands, f32 accumulation,
# bias folded into the input projection) — used for the strict correctness check.
# ----------------------------------------------------------------------------
def mirror_reference(x, params, step=STEP, threshold=THRESHOLD):
    bf = jnp.bfloat16
    batch = x.shape[0]
    H = HIDDEN_DIM
    w_ih = jnp.asarray(params["w_ih"], jnp.float32).T.astype(bf)     # (in, 4H) [i|f|g|o]
    w_hh = jnp.asarray(params["w_hh"], jnp.float32).T.astype(bf)     # (H, 4H)
    b = (params["b_ih"] + params["b_hh"]).astype(jnp.float32)
    w_fc = jnp.asarray(params["w_fc"], jnp.float32).T.astype(bf)     # (H, C)
    b_fc = jnp.asarray(params["b_fc"], jnp.float32)
    h = jnp.zeros((batch, H), jnp.float32)
    c = jnp.zeros((batch, H), jnp.float32)
    for t in range(step):
        xw = jnp.dot(x[:, t, :].astype(bf), w_ih,
                     preferred_element_type=jnp.float32) + b
        if t == 0:
            gates = xw
        else:
            gates = xw + jnp.dot(h.astype(bf), w_hh,
                                 preferred_element_type=jnp.float32)
        i_g = jax.nn.sigmoid(gates[:, 0 * H:1 * H])
        f_g = jax.nn.sigmoid(gates[:, 1 * H:2 * H])
        g_g = jnp.tanh(gates[:, 2 * H:3 * H])
        o_g = jax.nn.sigmoid(gates[:, 3 * H:4 * H])
        c = f_g * c + i_g * g_g
        h = o_g * jnp.tanh(c)
    logits = jnp.dot(h.astype(bf), w_fc, preferred_element_type=jnp.float32) + b_fc
    m = jnp.max(logits, axis=1, keepdims=True)
    conf = (1.0 / jnp.sum(jnp.exp(logits - m), axis=1, keepdims=True))[:, 0]
    preds = jnp.argmax(logits, axis=1).astype(jnp.int32)
    early = conf >= threshold
    return preds, conf, early


if __name__ == "__main__":
    key = jax.random.PRNGKey(0)
    k_param, k_x = jax.random.split(key)

    params = init_params(k_param)
    prepped = prepare_params(params)          # one-time weight prep (not per-call)
    # Matches the reference script: x = torch.rand(4, 20, input_dim)
    x = jax.random.uniform(k_x, (4, 20, INPUT_DIM), dtype=jnp.float32)

    preds, conf, early = cot_early_tsc_forward(x, prepped, step=STEP,
                                               threshold=THRESHOLD)
    jax.block_until_ready((preds, conf, early))

    # Strict check against a pure-JAX mirror of the kernel's numerics.
    m_preds, m_conf, m_early = mirror_reference(x, params, step=STEP,
                                                threshold=THRESHOLD)
    assert jnp.all(preds == m_preds), (preds, m_preds)
    assert jnp.allclose(conf, m_conf, atol=1e-4, rtol=1e-4), (conf, m_conf)
    assert jnp.all(early == m_early), (early, m_early)

    # Loose check against the fp32 torch-style reference (bf16 weights give
    # ~1e-3-level drift in confidence; semantics otherwise identical).
    _, r_conf, _ = reference_forward(x, params, step=STEP, threshold=THRESHOLD)
    assert jnp.allclose(conf, r_conf, atol=1e-2), (conf, r_conf)

    print("KERNEL_OK")
</pallas_src>

<mosaic_0001>
module attributes {stable_mosaic.version = 11 : i64} {
  func.func @_cot_early_tsc_kernel(%arg0: memref<40x3xbf16, #tpu.memory_space<vmem>>, %arg1: memref<80x128xbf16, #tpu.memory_space<vmem>>, %arg2: memref<8x128xf32, #tpu.memory_space<vmem>>, %arg3: memref<8x128xf32, #tpu.memory_space<vmem>>) attributes {dimension_semantics = [], scalar_prefetch = 0 : i64, scratch_operands = 0 : i64, tpu.core_type = #tpu.core_type<tc>} {
    %c0 = arith.constant 0 : index
    %c0_0 = arith.constant 0 : index
    %0 = vector.load %arg1[%c0, %c0_0] : memref<80x128xbf16, #tpu.memory_space<vmem>>, vector<3x128xbf16>
    %c16 = arith.constant 16 : index
    %c0_1 = arith.constant 0 : index
    %1 = vector.load %arg1[%c16, %c0_1] : memref<80x128xbf16, #tpu.memory_space<vmem>>, vector<32x128xbf16>
    %c48 = arith.constant 48 : index
    %c0_2 = arith.constant 0 : index
    %2 = vector.load %arg1[%c48, %c0_2] : memref<80x128xbf16, #tpu.memory_space<vmem>>, vector<32x128xbf16>
    %c0_3 = arith.constant 0 : index
    %c0_4 = arith.constant 0 : index
    %3 = vector.load %arg2[%c0_3, %c0_4] : memref<8x128xf32, #tpu.memory_space<vmem>>, vector<1x128xf32>
    %c1 = arith.constant 1 : index
    %c0_5 = arith.constant 0 : index
    %4 = vector.load %arg2[%c1, %c0_5] : memref<8x128xf32, #tpu.memory_space<vmem>>, vector<1x128xf32>
    %c0_6 = arith.constant 0 : index
    %c0_7 = arith.constant 0 : index
    %5 = vector.load %arg0[%c0_6, %c0_7] : memref<40x3xbf16, #tpu.memory_space<vmem>>, vector<40x3xbf16>
    %cst = arith.constant dense<0.000000e+00> : vector<40x128xf32>
    %6 = tpu.matmul %5, %0, %cst {dimension_numbers = #tpu.dot_dimension_numbers<[1], [0], [0], [1], [0, 0, 1, 1], [], []>} : vector<40x3xbf16>, vector<3x128xbf16>, vector<40x128xf32> -> vector<40x128xf32>
    %7 = vector.broadcast %3 : vector<1x128xf32> to vector<40x128xf32>
    %8 = arith.addf %6, %7 : vector<40x128xf32>
    %9 = vector.extract_strided_slice %8 {offsets = [0, 0], sizes = [8, 128], strides = [1, 1]} : vector<40x128xf32> to vector<8x128xf32>
    %cst_8 = arith.constant 0.000000e+00 : f32
    %10 = vector.broadcast %cst_8 : f32 to vector<8x32xf32>
    %11 = vector.extract_strided_slice %9 {offsets = [0, 0], sizes = [8, 96], strides = [1, 1]} : vector<8x128xf32> to vector<8x96xf32>
    %12 = arith.negf %11 : vector<8x96xf32>
    %13 = math.exp %12 : vector<8x96xf32>
    %cst_9 = arith.constant 1.000000e+00 : f32
    %14 = vector.broadcast %cst_9 : f32 to vector<8x96xf32>
    %15 = arith.addf %14, %13 : vector<8x96xf32>
    %16 = arith.divf %14, %15 : vector<8x96xf32>
    %17 = vector.extract_strided_slice %9 {offsets = [0, 96], sizes = [8, 32], strides = [1, 1]} : vector<8x128xf32> to vector<8x32xf32>
    %18 = math.tanh %17 : vector<8x32xf32>
    %19 = vector.extract_strided_slice %16 {offsets = [0, 0], sizes = [8, 32], strides = [1, 1]} : vector<8x96xf32> to vector<8x32xf32>
    %20 = vector.extract_strided_slice %16 {offsets = [0, 32], sizes = [8, 32], strides = [1, 1]} : vector<8x96xf32> to vector<8x32xf32>
    %21 = vector.extract_strided_slice %16 {offsets = [0, 64], sizes = [8, 32], strides = [1, 1]} : vector<8x96xf32> to vector<8x32xf32>
    %22 = arith.mulf %20, %10 : vector<8x32xf32>
    %23 = arith.mulf %19, %18 : vector<8x32xf32>
    %24 = arith.addf %22, %23 : vector<8x32xf32>
    %25 = math.tanh %24 : vector<8x32xf32>
    %26 = arith.mulf %21, %25 : vector<8x32xf32>
    %27 = arith.truncf %26 : vector<8x32xf32> to vector<8x32xbf16>
    %cst_10 = arith.constant dense<0.000000e+00> : vector<8x128xf32>
    %28 = tpu.matmul %27, %1, %cst_10 {dimension_numbers = #tpu.dot_dimension_numbers<[1], [0], [0], [1], [0, 0, 1, 1], [], []>} : vector<8x32xbf16>, vector<32x128xbf16>, vector<8x128xf32> -> vector<8x128xf32>
    %29 = vector.extract_strided_slice %8 {offsets = [8, 0], sizes = [8, 128], strides = [1, 1]} : vector<40x128xf32> to vector<8x128xf32>
    %30 = arith.addf %29, %28 : vector<8x128xf32>
    %31 = vector.extract_strided_slice %30 {offsets = [0, 0], sizes = [8, 96], strides = [1, 1]} : vector<8x128xf32> to vector<8x96xf32>
    %32 = arith.negf %31 : vector<8x96xf32>
    %33 = math.exp %32 : vector<8x96xf32>
    %cst_11 = arith.constant 1.000000e+00 : f32
    %34 = vector.broadcast %cst_11 : f32 to vector<8x96xf32>
    %35 = arith.addf %34, %33 : vector<8x96xf32>
    %36 = arith.divf %34, %35 : vector<8x96xf32>
    %37 = vector.extract_strided_slice %30 {offsets = [0, 96], sizes = [8, 32], strides = [1, 1]} : vector<8x128xf32> to vector<8x32xf32>
    %38 = math.tanh %37 : vector<8x32xf32>
    %39 = vector.extract_strided_slice %36 {offsets = [0, 0], sizes = [8, 32], strides = [1, 1]} : vector<8x96xf32> to vector<8x32xf32>
    %40 = vector.extract_strided_slice %36 {offsets = [0, 32], sizes = [8, 32], strides = [1, 1]} : vector<8x96xf32> to vector<8x32xf32>
    %41 = vector.extract_strided_slice %36 {offsets = [0, 64], sizes = [8, 32], strides = [1, 1]} : vector<8x96xf32> to vector<8x32xf32>
    %42 = arith.mulf %40, %24 : vector<8x32xf32>
    %43 = arith.mulf %39, %38 : vector<8x32xf32>
    %44 = arith.addf %42, %43 : vector<8x32xf32>
    %45 = math.tanh %44 : vector<8x32xf32>
    %46 = arith.mulf %41, %45 : vector<8x32xf32>
    %47 = arith.truncf %46 : vector<8x32xf32> to vector<8x32xbf16>
    %cst_12 = arith.constant dense<0.000000e+00> : vector<8x128xf32>
    %48 = tpu.matmul %47, %1, %cst_12 {dimension_numbers = #tpu.dot_dimension_numbers<[1], [0], [0], [1], [0, 0, 1, 1], [], []>} : vector<8x32xbf16>, vector<32x128xbf16>, vector<8x128xf32> -> vector<8x128xf32>
    %49 = vector.extract_strided_slice %8 {offsets = [16, 0], sizes = [8, 128], strides = [1, 1]} : vector<40x128xf32> to vector<8x128xf32>
    %50 = arith.addf %49, %48 : vector<8x128xf32>
    %51 = vector.extract_strided_slice %50 {offsets = [0, 0], sizes = [8, 96], strides = [1, 1]} : vector<8x128xf32> to vector<8x96xf32>
    %52 = arith.negf %51 : vector<8x96xf32>
    %53 = math.exp %52 : vector<8x96xf32>
    %cst_13 = arith.constant 1.000000e+00 : f32
    %54 = vector.broadcast %cst_13 : f32 to vector<8x96xf32>
    %55 = arith.addf %54, %53 : vector<8x96xf32>
    %56 = arith.divf %54, %55 : vector<8x96xf32>
    %57 = vector.extract_strided_slice %50 {offsets = [0, 96], sizes = [8, 32], strides = [1, 1]} : vector<8x128xf32> to vector<8x32xf32>
    %58 = math.tanh %57 : vector<8x32xf32>
    %59 = vector.extract_strided_slice %56 {offsets = [0, 0], sizes = [8, 32], strides = [1, 1]} : vector<8x96xf32> to vector<8x32xf32>
    %60 = vector.extract_strided_slice %56 {offsets = [0, 32], sizes = [8, 32], strides = [1, 1]} : vector<8x96xf32> to vector<8x32xf32>
    %61 = vector.extract_strided_slice %56 {offsets = [0, 64], sizes = [8, 32], strides = [1, 1]} : vector<8x96xf32> to vector<8x32xf32>
    %62 = arith.mulf %60, %44 : vector<8x32xf32>
    %63 = arith.mulf %59, %58 : vector<8x32xf32>
    %64 = arith.addf %62, %63 : vector<8x32xf32>
    %65 = math.tanh %64 : vector<8x32xf32>
    %66 = arith.mulf %61, %65 : vector<8x32xf32>
    %67 = arith.truncf %66 : vector<8x32xf32> to vector<8x32xbf16>
    %cst_14 = arith.constant dense<0.000000e+00> : vector<8x128xf32>
    %68 = tpu.matmul %67, %1, %cst_14 {dimension_numbers = #tpu.dot_dimension_numbers<[1], [0], [0], [1], [0, 0, 1, 1], [], []>} : vector<8x32xbf16>, vector<32x128xbf16>, vector<8x128xf32> -> vector<8x128xf32>
    %69 = vector.extract_strided_slice %8 {offsets = [24, 0], sizes = [8, 128], strides = [1, 1]} : vector<40x128xf32> to vector<8x128xf32>
    %70 = arith.addf %69, %68 : vector<8x128xf32>
    %71 = vector.extract_strided_slice %70 {offsets = [0, 0], sizes = [8, 96], strides = [1, 1]} : vector<8x128xf32> to vector<8x96xf32>
    %72 = arith.negf %71 : vector<8x96xf32>
    %73 = math.exp %72 : vector<8x96xf32>
    %cst_15 = arith.constant 1.000000e+00 : f32
    %74 = vector.broadcast %cst_15 : f32 to vector<8x96xf32>
    %75 = arith.addf %74, %73 : vector<8x96xf32>
    %76 = arith.divf %74, %75 : vector<8x96xf32>
    %77 = vector.extract_strided_slice %70 {offsets = [0, 96], sizes = [8, 32], strides = [1, 1]} : vector<8x128xf32> to vector<8x32xf32>
    %78 = math.tanh %77 : vector<8x32xf32>
    %79 = vector.extract_strided_slice %76 {offsets = [0, 0], sizes = [8, 32], strides = [1, 1]} : vector<8x96xf32> to vector<8x32xf32>
    %80 = vector.extract_strided_slice %76 {offsets = [0, 32], sizes = [8, 32], strides = [1, 1]} : vector<8x96xf32> to vector<8x32xf32>
    %81 = vector.extract_strided_slice %76 {offsets = [0, 64], sizes = [8, 32], strides = [1, 1]} : vector<8x96xf32> to vector<8x32xf32>
    %82 = arith.mulf %80, %64 : vector<8x32xf32>
    %83 = arith.mulf %79, %78 : vector<8x32xf32>
    %84 = arith.addf %82, %83 : vector<8x32xf32>
    %85 = math.tanh %84 : vector<8x32xf32>
    %86 = arith.mulf %81, %85 : vector<8x32xf32>
    %87 = arith.truncf %86 : vector<8x32xf32> to vector<8x32xbf16>
    %cst_16 = arith.constant dense<0.000000e+00> : vector<8x128xf32>
    %88 = tpu.matmul %87, %1, %cst_16 {dimension_numbers = #tpu.dot_dimension_numbers<[1], [0], [0], [1], [0, 0, 1, 1], [], []>} : vector<8x32xbf16>, vector<32x128xbf16>, vector<8x128xf32> -> vector<8x128xf32>
    %89 = vector.extract_strided_slice %8 {offsets = [32, 0], sizes = [8, 128], strides = [1, 1]} : vector<40x128xf32> to vector<8x128xf32>
    %90 = arith.addf %89, %88 : vector<8x128xf32>
    %91 = vector.extract_strided_slice %90 {offsets = [0, 0], sizes = [8, 96], strides = [1, 1]} : vector<8x128xf32> to vector<8x96xf32>
    %92 = arith.negf %91 : vector<8x96xf32>
    %93 = math.exp %92 : vector<8x96xf32>
    %cst_17 = arith.constant 1.000000e+00 : f32
    %94 = vector.broadcast %cst_17 : f32 to vector<8x96xf32>
    %95 = arith.addf %94, %93 : vector<8x96xf32>
    %96 = arith.divf %94, %95 : vector<8x96xf32>
    %97 = vector.extract_strided_slice %90 {offsets = [0, 96], sizes = [8, 32], strides = [1, 1]} : vector<8x128xf32> to vector<8x32xf32>
    %98 = math.tanh %97 : vector<8x32xf32>
    %99 = vector.extract_strided_slice %96 {offsets = [0, 0], sizes = [8, 32], strides = [1, 1]} : vector<8x96xf32> to vector<8x32xf32>
    %100 = vector.extract_strided_slice %96 {offsets = [0, 32], sizes = [8, 32], strides = [1, 1]} : vector<8x96xf32> to vector<8x32xf32>
    %101 = vector.extract_strided_slice %96 {offsets = [0, 64], sizes = [8, 32], strides = [1, 1]} : vector<8x96xf32> to vector<8x32xf32>
    %102 = arith.mulf %100, %84 : vector<8x32xf32>
    %103 = arith.mulf %99, %98 : vector<8x32xf32>
    %104 = arith.addf %102, %103 : vector<8x32xf32>
    %105 = math.tanh %104 : vector<8x32xf32>
    %106 = arith.mulf %101, %105 : vector<8x32xf32>
    %107 = arith.truncf %106 : vector<8x32xf32> to vector<8x32xbf16>
    %cst_18 = arith.constant dense<0.000000e+00> : vector<8x128xf32>
    %108 = tpu.matmul %107, %2, %cst_18 {dimension_numbers = #tpu.dot_dimension_numbers<[1], [0], [0], [1], [0, 0, 1, 1], [], []>} : vector<8x32xbf16>, vector<32x128xbf16>, vector<8x128xf32> -> vector<8x128xf32>
    %109 = vector.broadcast %4 : vector<1x128xf32> to vector<8x128xf32>
    %110 = arith.addf %108, %109 : vector<8x128xf32>
    %cst_19 = arith.constant dense<0xFF800000> : vector<8xf32>
    %111 = vector.multi_reduction <maximumf>, %110, %cst_19 [1] : vector<8x128xf32> to vector<8xf32>
    %112 = vector.shape_cast %111 : vector<8xf32> to vector<8x1xf32>
    %113 = vector.broadcast %112 : vector<8x1xf32> to vector<8x128xf32>
    %114 = arith.subf %110, %113 : vector<8x128xf32>
    %115 = math.exp %114 : vector<8x128xf32>
    %cst_20 = arith.constant dense<0.000000e+00> : vector<8xf32>
    %116 = vector.multi_reduction <add>, %115, %cst_20 [1] : vector<8x128xf32> to vector<8xf32>
    %117 = vector.shape_cast %116 : vector<8xf32> to vector<8x1xf32>
    %cst_21 = arith.constant 1.000000e+00 : f32
    %118 = vector.broadcast %cst_21 : f32 to vector<8x1xf32>
    %119 = arith.divf %118, %117 : vector<8x1xf32>
    %120 = tpu.iota {dimensions = array<i32: 1>} : vector<8x128xi32>
    %121 = vector.broadcast %112 : vector<8x1xf32> to vector<8x128xf32>
    %122 = arith.cmpf oeq, %110, %121 : vector<8x128xf32>
    %c128_i32 = arith.constant 128 : i32
    %123 = vector.broadcast %c128_i32 : i32 to vector<8x128xi32>
    %124 = arith.select %122, %120, %123 : vector<8x128xi1>, vector<8x128xi32>
    %cst_22 = arith.constant dense<2147483647> : vector<8xi32>
    %125 = vector.multi_reduction <minsi>, %124, %cst_22 [1] : vector<8x128xi32> to vector<8xi32>
    %126 = vector.shape_cast %125 : vector<8xi32> to vector<8x1xi32>
    %cst_23 = arith.constant 8.500000e-01 : f32
    %127 = vector.broadcast %cst_23 : f32 to vector<8x1xf32>
    %128 = arith.cmpf oge, %119, %127 : vector<8x1xf32>
    %129 = arith.extui %128 : vector<8x1xi1> to vector<8x1xi32>
    %130 = arith.sitofp %129 : vector<8x1xi32> to vector<8x1xf32>
    %131 = tpu.iota {dimensions = array<i32: 1>} : vector<8x128xi32>
    %c0_i32 = arith.constant 0 : i32
    %132 = vector.broadcast %c0_i32 : i32 to vector<8x128xi32>
    %133 = arith.cmpi eq, %131, %132 : vector<8x128xi32>
    %cst_24 = arith.constant 0.000000e+00 : f32
    %134 = vector.shape_cast %119 : vector<8x1xf32> to vector<8x1xf32>
    %135 = vector.broadcast %134 : vector<8x1xf32> to vector<8x128xf32>
    %136 = vector.broadcast %cst_24 : f32 to vector<8x128xf32>
    %137 = arith.select %133, %135, %136 : vector<8x128xi1>, vector<8x128xf32>
    %c1_i32 = arith.constant 1 : i32
    %138 = vector.broadcast %c1_i32 : i32 to vector<8x128xi32>
    %139 = arith.cmpi eq, %131, %138 : vector<8x128xi32>
    %140 = arith.sitofp %126 : vector<8x1xi32> to vector<8x1xf32>
    %141 = vector.shape_cast %140 : vector<8x1xf32> to vector<8x1xf32>
    %142 = vector.broadcast %141 : vector<8x1xf32> to vector<8x128xf32>
    %143 = arith.select %139, %142, %137 : vector<8x128xi1>, vector<8x128xf32>
    %c2_i32 = arith.constant 2 : i32
    %144 = vector.broadcast %c2_i32 : i32 to vector<8x128xi32>
    %145 = arith.cmpi eq, %131, %144 : vector<8x128xi32>
    %146 = vector.shape_cast %130 : vector<8x1xf32> to vector<8x1xf32>
    %147 = vector.broadcast %146 : vector<8x1xf32> to vector<8x128xf32>
    %148 = arith.select %145, %147, %143 : vector<8x128xi1>, vector<8x128xf32>
    %c0_25 = arith.constant 0 : index
    %c0_26 = arith.constant 0 : index
    %149 = vector.load %arg3[%c0_25, %c0_26] : memref<8x128xf32, #tpu.memory_space<vmem>>, vector<8x128xf32>
    tpu.vector_store %arg3[%c0_25, %c0_26], %148 {strides = array<i32>} : memref<8x128xf32, #tpu.memory_space<vmem>>, vector<8x128xf32>,
    return
  }
}

</mosaic_0001>

<llo_original>
// kernel: cot_early_tsc_forward.1
$region0: #{cot_early_tsc_forward.1}
  #allocation0 [shape = 'u32[]', space=smem, size = 0x4, offset = 0x4, fixed_abs, tag = 'smem constant byte address 0x4 - core index']
  #allocation1 [shape = 'u32[144,128]{1,0:T(1,128)}', space=vmem, size = 0x12000, scoped, tag = 'internal scratch']
  %s0 = inlined_call_operand.vmem [shape: bf16[40,3], index: 0, kind: input, shape index: {}]
  %s1 = inlined_call_operand.vmem [shape: bf16[80,128], index: 1, kind: input, shape index: {}]
  %s2 = inlined_call_operand.vmem [shape: f32[8,128], index: 2, kind: input, shape index: {}]
  %s3 = inlined_call_operand.vmem [shape: f32[8,128], index: 3, kind: output, shape index: {}]
  %s4 = sld [smem:[#allocation0]]
  $region22: #{cot_early_tsc_forward.1} parent=0
    _
  %s6 = ssub.s32 1, %s4
  %s7 = scalar_select 0, %s6, %s4
  // Predicated region
  $region2: #{cot_early_tsc_forward.1} parent=0 // pred_check
    _
  $region3: #{cot_early_tsc_forward.1} parent=0 // pred_check_branch
    %9 = sbr.rel (0) target = $region5
  $region4: #{cot_early_tsc_forward.1} parent=0 // pred_region
    _
  $region5: #{cot_early_tsc_forward.1} parent=0 // pred_fallthru
    _
  // Predicated region
  $region6: #{cot_early_tsc_forward.1} parent=0 // pred_check
    _
  $region7: #{cot_early_tsc_forward.1} parent=0 // pred_check_branch
    %11 = sbr.rel (0) target = $region9
  $region8: #{cot_early_tsc_forward.1} parent=0 // pred_region
    _
  $region9: #{cot_early_tsc_forward.1} parent=0 // pred_fallthru
    _
  // Predicated region
  $region10: #{cot_early_tsc_forward.1} parent=0 // pred_check
    _
  $region11: #{cot_early_tsc_forward.1} parent=0 // pred_check_branch
    %13 = sbr.rel (0) target = $region13
  $region12: #{cot_early_tsc_forward.1} parent=0 // pred_region
    _
  $region13: #{cot_early_tsc_forward.1} parent=0 // pred_fallthru
    _
  %v15 = vld [vmem:[%s1] sm:$0x3]
  %v16 = vld [vmem:[%s1 + $0x8] sm:$0xf]
  %v17 = vld [vmem:[%s1 + $0xc] sm:$0xf]
  %v18 = vld [vmem:[%s1 + $0x10] sm:$0xf]
  %v19 = vld [vmem:[%s1 + $0x14] sm:$0xf]
  %v20 = vld [vmem:[%s1 + $0x18] sm:$0xf]
  %v21 = vld [vmem:[%s1 + $0x1c] sm:$0xf]
  %v22 = vld [vmem:[%s1 + $0x20] sm:$0xf]
  %v23 = vld [vmem:[%s1 + $0x24] sm:$0xf]
  %v24 = vld [vmem:[%s2] sm:$0x1]
  %v25 = vld [vmem:[%s2 + $0x1] sm:$0x1]
  %v26 = vld [vmem:[%s0] sm:$0xf]
  %v27 = vld [vmem:[%s0 + $0x4] sm:$0xf]
  %v28 = vld [vmem:[%s0 + $0x8] sm:$0xf]
  %v29 = vld [vmem:[%s0 + $0xc] sm:$0xf]
  %v30 = vld [vmem:[%s0 + $0x10] sm:$0xf]
  %v31 = vlaneseq
  %v32 = vshrl.u32 %v31, 7
  %v33 = vsub.s32 0, %v32
  %v34 = vrot.slane %v24, %v33
  %v40 = vunpack.c.l.b16 %v26
  %v41 = vunpack.c.l.b16 %v27
  %v42 = vunpack.c.l.b16 %v28
  %v43 = vunpack.c.l.b16 %v29
  %v44 = vunpack.c.l.b16 %v30
  %v45 = vpack.c.b16 %v41, %v40
  %v46 = vpack.c.b16 %v43, %v42
  %v47 = vpack.c.b16 %v44, %v44
  %vm48 = vcmask 23552
  %v50 = vsel %vm48, %v45, 0
  %v53 = vsel %vm48, %v46, 0
  %v56 = vsel %vm48, %v47, 0
  %vm58 = vcmask 1040384
  %vm59 = vcmask 1041408
  %v60 = vsel %vm58, 4294967295, 65535
  %v61 = vsel %vm59, %v60, 0
  %v63 = vand.u32 %v15, %v61
  %65 = vmatprep.subr.bf16.mxu0 0
  %66 = vmatpush1.bf16.msra.mxu0 0
  %67 = vmatprep.subr.bf16.mxu0 0
  %68 = vmatpush1.bf16.msra.mxu0 0
  %69 = vmatprep.subr.bf16.mxu0 0
  %70 = vmatpush1.bf16.msra.mxu0 0
  %71 = vmatprep.subr.bf16.mxu0 0
  %72 = vmatpush1.bf16.msra.mxu0 0
  %73 = vmatprep.subr.bf16.mxu0 0
  %74 = vmatpush1.bf16.msra.mxu0 0
  %75 = vmatprep.subr.bf16.mxu0 0
  %76 = vmatpush1.bf16.msra.mxu0 0
  %77 = vmatprep.subr.bf16.mxu0 0
  %78 = vmatpush1.bf16.msra.mxu0 0
  %79 = vmatprep.subr.bf16.mxu0 0
  %80 = vmatpush1.bf16.msra.mxu0 %v63
  %81 = vmatprep.subr.bf16.mxu0 0
  %82 = vmatpush2.bf16.msra.mxu0 0
  %83 = vmatprep.subr.bf16.mxu0 0
  %84 = vmatpush2.bf16.msra.mxu0 0
  %85 = vmatprep.subr.bf16.mxu0 0
  %86 = vmatpush2.bf16.msra.mxu0 0
  %87 = vmatprep.subr.bf16.mxu0 0
  %88 = vmatpush2.bf16.msra.mxu0 0
  %89 = vmatprep.subr.bf16.mxu0 0
  %90 = vmatpush2.bf16.msra.mxu0 0
  %91 = vmatprep.subr.bf16.mxu0 0
  %92 = vmatpush2.bf16.msra.mxu0 0
  %93 = vmatprep.subr.bf16.mxu0 0
  %94 = vmatpush2.bf16.msra.mxu0 0
  %95 = vmatprep.subr.bf16.mxu0 0
  %96 = vmatpush2.bf16.msra.mxu0 0
  %97 = vmatprep.mubr.bf16.mxu0 0
  %98 = vmatmul.mubr.bf16.gmra.mxu0 %v50
  %v99 = vpop.f32.mrf.mxu0
  %v100 = vadd.f32 %v34, %v99
  %v101 = vpop.f32.mrf.mxu0
  %v102 = vpop.f32.mrf.mxu0
  %v103 = vadd.f32 %v34, %v102
  %v104 = vpop.f32.mrf.mxu0
  %105 = vmatprep.mubr.bf16.mxu0 0
  %106 = vmatmul.mubr.bf16.gmra.mxu0 %v53
  %v107 = vpop.f32.mrf.mxu0
  %v108 = vadd.f32 %v34, %v107
  %v109 = vpop.f32.mrf.mxu0
  %v110 = vpop.f32.mrf.mxu0
  %v111 = vadd.f32 %v34, %v110
  %v112 = vpop.f32.mrf.mxu0
  %113 = vmatprep.mubr.bf16.mxu0 0
  %114 = vmatmul.mubr.bf16.gmra.mxu0 %v56
  %v115 = vpop.f32.mrf.mxu0
  %v116 = vadd.f32 %v34, %v115
  %v117 = vpop.f32.mrf.mxu0
  %v118 = vpop.f32.mrf.mxu0
  %v119 = vpop.f32.mrf.mxu0
  %120 = vdwg.mxu0
  %v121 = vxor.u32 %v100, 2147483648
  %v122 = vmul.f32 %v121, 1.442695
  %v123 = vpow.pop %v122
  %v124 = vadd.f32 %v123, 1.0
  %v125 = vrcp.pop %v124
  %v126 = vmul.f32 1.0, %v125
  %v127 = vtanh.pop %v100
  %v128 = vmul.f32 %v126, 0.0
  %130 = vrot.lane.b32.xlu0 %v127, 32
  %v131 = vpop.permute.xlu0 %130
  %v133 = vmul.f32 %v126, %v131
  %135 = vrot.lane.b32.xlu0 %v133, 32
  %v136 = vpop.permute.xlu0 %135
  %v138 = vadd.f32 %v128, %v136
  %v139 = vtanh.pop %v138
  %141 = vrot.lane.b32.xlu0 %v139, 32
  %v142 = vpop.permute.xlu0 %141
  %v144 = vmul.f32 %v126, %v142
  %v145 = vpack.c.bf16 %v144, %v144
  %147 = vrot.lane.b32.xlu0 %v145, 64
  %v148 = vpop.permute.xlu0 %147
  %v153 = vunpack.c.l.b16 %v16
  %v154 = vunpack.c.l.b16 %v17
  %v155 = vunpack.c.l.b16 %v18
  %v156 = vunpack.c.l.b16 %v19
  %v157 = vpack.c.b16 %v154, %v153
  %v158 = vpack.c.b16 %v156, %v155
  %vm161 = vcmask 261120
  %v163 = vsel %vm161, %v148, 0
  %165 = vmatprep.subr.bf16.mxu0 0
  %166 = vmatpush1.bf16.msra.mxu0 0
  %167 = vmatprep.subr.bf16.mxu0 0
  %168 = vmatpush1.bf16.msra.mxu0 0
  %169 = vmatprep.subr.bf16.mxu0 0
  %170 = vmatpush1.bf16.msra.mxu0 0
  %171 = vmatprep.subr.bf16.mxu0 0
  %172 = vmatpush1.bf16.msra.mxu0 0
  %173 = vmatprep.subr.bf16.mxu0 0
  %174 = vmatpush1.bf16.msra.mxu0 0
  %175 = vmatprep.subr.bf16.mxu0 0
  %176 = vmatpush1.bf16.msra.mxu0 0
  %177 = vmatprep.subr.bf16.mxu0 0
  %178 = vmatpush1.bf16.msra.mxu0 %v158
  %179 = vmatprep.subr.bf16.mxu0 0
  %180 = vmatpush1.bf16.msra.mxu0 %v157
  %181 = vmatprep.subr.bf16.mxu0 0
  %182 = vmatpush2.bf16.msra.mxu0 0
  %183 = vmatprep.subr.bf16.mxu0 0
  %184 = vmatpush2.bf16.msra.mxu0 0
  %185 = vmatprep.subr.bf16.mxu0 0
  %186 = vmatpush2.bf16.msra.mxu0 0
  %187 = vmatprep.subr.bf16.mxu0 0
  %188 = vmatpush2.bf16.msra.mxu0 0
  %189 = vmatprep.subr.bf16.mxu0 0
  %190 = vmatpush2.bf16.msra.mxu0 0
  %191 = vmatprep.subr.bf16.mxu0 0
  %192 = vmatpush2.bf16.msra.mxu0 0
  %193 = vmatprep.subr.bf16.mxu0 0
  %194 = vmatpush2.bf16.msra.mxu0 0
  %195 = vmatprep.subr.bf16.mxu0 0
  %196 = vmatpush2.bf16.msra.mxu0 0
  %197 = vmatprep.mubr.bf16.mxu0 0
  %198 = vmatmul.mubr.bf16.gmra.mxu0 %v163
  %v199 = vpop.f32.mrf.mxu0
  %v200 = vadd.f32 0.0, %v199
  %v201 = vpop.f32.mrf.mxu0
  %v202 = vpop.f32.mrf.mxu0
  %v203 = vpop.f32.mrf.mxu0
  %204 = vdwg.mxu0
  %v205 = vadd.f32 %v103, %v200
  %v206 = vxor.u32 %v205, 2147483648
  %v207 = vmul.f32 %v206, 1.442695
  %v208 = vpow.pop %v207
  %v209 = vadd.f32 %v208, 1.0
  %v210 = vrcp.pop %v209
  %v211 = vmul.f32 1.0, %v210
  %v212 = vtanh.pop %v205
  %v213 = vmul.f32 %v211, %v138
  %215 = vrot.lane.b32.xlu0 %v212, 32
  %v216 = vpop.permute.xlu0 %215
  %v218 = vmul.f32 %v211, %v216
  %220 = vrot.lane.b32.xlu0 %v218, 32
  %v221 = vpop.permute.xlu0 %220
  %v223 = vadd.f32 %v213, %v221
  %v224 = vtanh.pop %v223
  %226 = vrot.lane.b32.xlu0 %v224, 32
  %v227 = vpop.permute.xlu0 %226
  %v229 = vmul.f32 %v211, %v227
  %v230 = vpack.c.bf16 %v229, %v229
  %232 = vrot.lane.b32.xlu0 %v230, 64
  %v233 = vpop.permute.xlu0 %232
  %v235 = vsel %vm161, %v233, 0
  %237 = vmatprep.subr.bf16.mxu0 0
  %238 = vmatpush1.bf16.msra.mxu0 0
  %239 = vmatprep.subr.bf16.mxu0 0
  %240 = vmatpush1.bf16.msra.mxu0 0
  %241 = vmatprep.subr.bf16.mxu0 0
  %242 = vmatpush1.bf16.msra.mxu0 0
  %243 = vmatprep.subr.bf16.mxu0 0
  %244 = vmatpush1.bf16.msra.mxu0 0
  %245 = vmatprep.subr.bf16.mxu0 0
  %246 = vmatpush1.bf16.msra.mxu0 0
  %247 = vmatprep.subr.bf16.mxu0 0
  %248 = vmatpush1.bf16.msra.mxu0 0
  %249 = vmatprep.subr.bf16.mxu0 0
  %250 = vmatpush1.bf16.msra.mxu0 %v158
  %251 = vmatprep.subr.bf16.mxu0 0
  %252 = vmatpush1.bf16.msra.mxu0 %v157
  %253 = vmatprep.subr.bf16.mxu0 0
  %254 = vmatpush2.bf16.msra.mxu0 0
  %255 = vmatprep.subr.bf16.mxu0 0
  %256 = vmatpush2.bf16.msra.mxu0 0
  %257 = vmatprep.subr.bf16.mxu0 0
  %258 = vmatpush2.bf16.msra.mxu0 0
  %259 = vmatprep.subr.bf16.mxu0 0
  %260 = vmatpush2.bf16.msra.mxu0 0
  %261 = vmatprep.subr.bf16.mxu0 0
  %262 = vmatpush2.bf16.msra.mxu0 0
  %263 = vmatprep.subr.bf16.mxu0 0
  %264 = vmatpush2.bf16.msra.mxu0 0
  %265 = vmatprep.subr.bf16.mxu0 0
  %266 = vmatpush2.bf16.msra.mxu0 0
  %267 = vmatprep.subr.bf16.mxu0 0
  %268 = vmatpush2.bf16.msra.mxu0 0
  %269 = vmatprep.mubr.bf16.mxu0 0
  %270 = vmatmul.mubr.bf16.gmra.mxu0 %v235
  %v271 = vpop.f32.mrf.mxu0
  %v272 = vadd.f32 0.0, %v271
  %v273 = vpop.f32.mrf.mxu0
  %v274 = vpop.f32.mrf.mxu0
  %v275 = vpop.f32.mrf.mxu0
  %276 = vdwg.mxu0
  %v277 = vadd.f32 %v108, %v272
  %v278 = vxor.u32 %v277, 2147483648
  %v279 = vmul.f32 %v278, 1.442695
  %v280 = vpow.pop %v279
  %v281 = vadd.f32 %v280, 1.0
  %v282 = vrcp.pop %v281
  %v283 = vmul.f32 1.0, %v282
  %v284 = vtanh.pop %v277
  %v285 = vmul.f32 %v283, %v223
  %287 = vrot.lane.b32.xlu0 %v284, 32
  %v288 = vpop.permute.xlu0 %287
  %v290 = vmul.f32 %v283, %v288
  %292 = vrot.lane.b32.xlu0 %v290, 32
  %v293 = vpop.permute.xlu0 %292
  %v295 = vadd.f32 %v285, %v293
  %v296 = vtanh.pop %v295
  %298 = vrot.lane.b32.xlu0 %v296, 32
  %v299 = vpop.permute.xlu0 %298
  %v301 = vmul.f32 %v283, %v299
  %v302 = vpack.c.bf16 %v301, %v301
  %304 = vrot.lane.b32.xlu0 %v302, 64
  %v305 = vpop.permute.xlu0 %304
  %v307 = vsel %vm161, %v305, 0
  %309 = vmatprep.subr.bf16.mxu0 0
  %310 = vmatpush1.bf16.msra.mxu0 0
  %311 = vmatprep.subr.bf16.mxu0 0
  %312 = vmatpush1.bf16.msra.mxu0 0
  %313 = vmatprep.subr.bf16.mxu0 0
  %314 = vmatpush1.bf16.msra.mxu0 0
  %315 = vmatprep.subr.bf16.mxu0 0
  %316 = vmatpush1.bf16.msra.mxu0 0
  %317 = vmatprep.subr.bf16.mxu0 0
  %318 = vmatpush1.bf16.msra.mxu0 0
  %319 = vmatprep.subr.bf16.mxu0 0
  %320 = vmatpush1.bf16.msra.mxu0 0
  %321 = vmatprep.subr.bf16.mxu0 0
  %322 = vmatpush1.bf16.msra.mxu0 %v158
  %323 = vmatprep.subr.bf16.mxu0 0
  %324 = vmatpush1.bf16.msra.mxu0 %v157
  %325 = vmatprep.subr.bf16.mxu0 0
  %326 = vmatpush2.bf16.msra.mxu0 0
  %327 = vmatprep.subr.bf16.mxu0 0
  %328 = vmatpush2.bf16.msra.mxu0 0
  %329 = vmatprep.subr.bf16.mxu0 0
  %330 = vmatpush2.bf16.msra.mxu0 0
  %331 = vmatprep.subr.bf16.mxu0 0
  %332 = vmatpush2.bf16.msra.mxu0 0
  %333 = vmatprep.subr.bf16.mxu0 0
  %334 = vmatpush2.bf16.msra.mxu0 0
  %335 = vmatprep.subr.bf16.mxu0 0
  %336 = vmatpush2.bf16.msra.mxu0 0
  %337 = vmatprep.subr.bf16.mxu0 0
  %338 = vmatpush2.bf16.msra.mxu0 0
  %339 = vmatprep.subr.bf16.mxu0 0
  %340 = vmatpush2.bf16.msra.mxu0 0
  %341 = vmatprep.mubr.bf16.mxu0 0
  %342 = vmatmul.mubr.bf16.gmra.mxu0 %v307
  %v343 = vpop.f32.mrf.mxu0
  %v344 = vadd.f32 0.0, %v343
  %v345 = vpop.f32.mrf.mxu0
  %v346 = vpop.f32.mrf.mxu0
  %v347 = vpop.f32.mrf.mxu0
  %348 = vdwg.mxu0
  %v349 = vadd.f32 %v111, %v344
  %v350 = vxor.u32 %v349, 2147483648
  %v351 = vmul.f32 %v350, 1.442695
  %v352 = vpow.pop %v351
  %v353 = vadd.f32 %v352, 1.0
  %v354 = vrcp.pop %v353
  %v355 = vmul.f32 1.0, %v354
  %v356 = vtanh.pop %v349
  %v357 = vmul.f32 %v355, %v295
  %359 = vrot.lane.b32.xlu0 %v356, 32
  %v360 = vpop.permute.xlu0 %359
  %v362 = vmul.f32 %v355, %v360
  %364 = vrot.lane.b32.xlu0 %v362, 32
  %v365 = vpop.permute.xlu0 %364
  %v367 = vadd.f32 %v357, %v365
  %v368 = vtanh.pop %v367
  %370 = vrot.lane.b32.xlu0 %v368, 32
  %v371 = vpop.permute.xlu0 %370
  %v373 = vmul.f32 %v355, %v371
  %v374 = vpack.c.bf16 %v373, %v373
  %376 = vrot.lane.b32.xlu0 %v374, 64
  %v377 = vpop.permute.xlu0 %376
  %v379 = vsel %vm161, %v377, 0
  %381 = vmatprep.subr.bf16.mxu0 0
  %382 = vmatpush1.bf16.msra.mxu0 0
  %383 = vmatprep.subr.bf16.mxu0 0
  %384 = vmatpush1.bf16.msra.mxu0 0
  %385 = vmatprep.subr.bf16.mxu0 0
  %386 = vmatpush1.bf16.msra.mxu0 0
  %387 = vmatprep.subr.bf16.mxu0 0
  %388 = vmatpush1.bf16.msra.mxu0 0
  %389 = vmatprep.subr.bf16.mxu0 0
  %390 = vmatpush1.bf16.msra.mxu0 0
  %391 = vmatprep.subr.bf16.mxu0 0
  %392 = vmatpush1.bf16.msra.mxu0 0
  %393 = vmatprep.subr.bf16.mxu0 0
  %394 = vmatpush1.bf16.msra.mxu0 %v158
  %395 = vmatprep.subr.bf16.mxu0 0
  %396 = vmatpush1.bf16.msra.mxu0 %v157
  %397 = vmatprep.subr.bf16.mxu0 0
  %398 = vmatpush2.bf16.msra.mxu0 0
  %399 = vmatprep.subr.bf16.mxu0 0
  %400 = vmatpush2.bf16.msra.mxu0 0
  %401 = vmatprep.subr.bf16.mxu0 0
  %402 = vmatpush2.bf16.msra.mxu0 0
  %403 = vmatprep.subr.bf16.mxu0 0
  %404 = vmatpush2.bf16.msra.mxu0 0
  %405 = vmatprep.subr.bf16.mxu0 0
  %406 = vmatpush2.bf16.msra.mxu0 0
  %407 = vmatprep.subr.bf16.mxu0 0
  %408 = vmatpush2.bf16.msra.mxu0 0
  %409 = vmatprep.subr.bf16.mxu0 0
  %410 = vmatpush2.bf16.msra.mxu0 0
  %411 = vmatprep.subr.bf16.mxu0 0
  %412 = vmatpush2.bf16.msra.mxu0 0
  %413 = vmatprep.mubr.bf16.mxu0 0
  %414 = vmatmul.mubr.bf16.gmra.mxu0 %v379
  %v415 = vpop.f32.mrf.mxu0
  %v416 = vadd.f32 0.0, %v415
  %v417 = vpop.f32.mrf.mxu0
  %v418 = vpop.f32.mrf.mxu0
  %v419 = vpop.f32.mrf.mxu0
  %420 = vdwg.mxu0
  %v421 = vadd.f32 %v116, %v416
  %v422 = vxor.u32 %v421, 2147483648
  %v423 = vmul.f32 %v422, 1.442695
  %v424 = vpow.pop %v423
  %v425 = vadd.f32 %v424, 1.0
  %v426 = vrcp.pop %v425
  %v427 = vmul.f32 1.0, %v426
  %v428 = vtanh.pop %v421
  %v429 = vmul.f32 %v427, %v367
  %431 = vrot.lane.b32.xlu0 %v428, 32
  %v432 = vpop.permute.xlu0 %431
  %v434 = vmul.f32 %v427, %v432
  %436 = vrot.lane.b32.xlu0 %v434, 32
  %v437 = vpop.permute.xlu0 %436
  %v439 = vadd.f32 %v429, %v437
  %v440 = vtanh.pop %v439
  %442 = vrot.lane.b32.xlu0 %v440, 32
  %v443 = vpop.permute.xlu0 %442
  %v445 = vmul.f32 %v427, %v443
  %v446 = vpack.c.bf16 %v445, %v445
  %v447 = vlaneseq
  %v448 = vshrl.u32 %v447, 7
  %v449 = vsub.s32 0, %v448
  %v450 = vrot.slane %v25, %v449
  %452 = vrot.lane.b32.xlu0 %v446, 64
  %v453 = vpop.permute.xlu0 %452
  %v458 = vunpack.c.l.b16 %v20
  %v459 = vunpack.c.l.b16 %v21
  %v460 = vunpack.c.l.b16 %v22
  %v461 = vunpack.c.l.b16 %v23
  %v462 = vpack.c.b16 %v459, %v458
  %v463 = vpack.c.b16 %v461, %v460
  %v467 = vsel %vm161, %v453, 0
  %469 = vmatprep.subr.bf16.mxu0 0
  %470 = vmatpush1.bf16.msra.mxu0 0
  %471 = vmatprep.subr.bf16.mxu0 0
  %472 = vmatpush1.bf16.msra.mxu0 0
  %473 = vmatprep.subr.bf16.mxu0 0
  %474 = vmatpush1.bf16.msra.mxu0 0
  %475 = vmatprep.subr.bf16.mxu0 0
  %476 = vmatpush1.bf16.msra.mxu0 0
  %477 = vmatprep.subr.bf16.mxu0 0
  %478 = vmatpush1.bf16.msra.mxu0 0
  %479 = vmatprep.subr.bf16.mxu0 0
  %480 = vmatpush1.bf16.msra.mxu0 0
  %481 = vmatprep.subr.bf16.mxu0 0
  %482 = vmatpush1.bf16.msra.mxu0 %v463
  %483 = vmatprep.subr.bf16.mxu0 0
  %484 = vmatpush1.bf16.msra.mxu0 %v462
  %485 = vmatprep.subr.bf16.mxu0 0
  %486 = vmatpush2.bf16.msra.mxu0 0
  %487 = vmatprep.subr.bf16.mxu0 0
  %488 = vmatpush2.bf16.msra.mxu0 0
  %489 = vmatprep.subr.bf16.mxu0 0
  %490 = vmatpush2.bf16.msra.mxu0 0
  %491 = vmatprep.subr.bf16.mxu0 0
  %492 = vmatpush2.bf16.msra.mxu0 0
  %493 = vmatprep.subr.bf16.mxu0 0
  %494 = vmatpush2.bf16.msra.mxu0 0
  %495 = vmatprep.subr.bf16.mxu0 0
  %496 = vmatpush2.bf16.msra.mxu0 0
  %497 = vmatprep.subr.bf16.mxu0 0
  %498 = vmatpush2.bf16.msra.mxu0 0
  %499 = vmatprep.subr.bf16.mxu0 0
  %500 = vmatpush2.bf16.msra.mxu0 0
  %501 = vmatprep.mubr.bf16.mxu0 0
  %502 = vmatmul.mubr.bf16.gmra.mxu0 %v467
  %v503 = vpop.f32.mrf.mxu0
  %v504 = vadd.f32 %v450, %v503
  %v505 = vpop.f32.mrf.mxu0
  %v506 = vpop.f32.mrf.mxu0
  %v507 = vpop.f32.mrf.mxu0
  %508 = vdwg.mxu0
  %509 = vmax.xlane.f32.xlu0 %v504
  %v510 = vpop.xlane.xlu0 %509
  %v511 = vsub.f32 %v504, %v510
  %v512 = vmul.f32 %v511, 1.442695
  %v513 = vpow.pop %v512
  %514 = vadd.xlane.f32.xlu0 %v513
  %v515 = vpop.xlane.xlu0 %514
  %v516 = vrcp.pop %v515
  %v517 = vmul.f32 1.0, %v516
  %v518 = vlaneseq
  %v519 = vand.u32 %v518, 127
  %vm520 = vcmp.eq.f32.partialorder %v504, %v510
  %v521 = vsel %vm520, %v519, 128
  %v522 = vand.u32 %v521, 65535
  %v523 = vshra.s32 %v521, 16
  %v524 = vcvt.s32.f32 %v522
  %v525 = vcvt.s32.f32 %v523
  %526 = vmin.xlane.f32.xlu0 %v525
  %v527 = vpop.xlane.xlu0 %526
  %vm528 = vcmp.eq.f32.partialorder %v525, %v527
  %v529 = vsel %vm528, %v524, inf
  %530 = vmin.xlane.f32.xlu0 %v529
  %v531 = vpop.xlane.xlu0 %530
  %v532 = vcvt.f32.s32 %v531
  %v533 = vcvt.f32.s32 %v527
  %v534 = vshll.u32 %v533, 16
  %v535 = vadd.s32 %v534, %v532
  %vm536 = vcmp.ge.f32.partialorder %v517, 0.85
  %v537 = vsel %vm536, 1, 0
  %v538 = vcvt.s32.f32 %v537
  %vm539 = vcmp.eq.s32.totalorder %v519, 0
  %v540 = vsel %vm539, %v517, 0.0
  %vm541 = vcmp.eq.s32.totalorder %v519, 1
  %v542 = vcvt.s32.f32 %v535
  %v543 = vsel %vm541, %v542, %v540
  %vm544 = vcmp.eq.s32.totalorder %v519, 2
  %v545 = vsel %vm544, %v538, %v543
  %546 = vst [vmem:[%s3] sm:$0xff] %v545
  // Predicated region
  $region14: #{cot_early_tsc_forward.1} parent=0 // pred_check
    _
  $region15: #{cot_early_tsc_forward.1} parent=0 // pred_check_branch
    %548 = sbr.rel (0) target = $region17
  $region16: #{cot_early_tsc_forward.1} parent=0 // pred_region
    _
  $region17: #{cot_early_tsc_forward.1} parent=0 // pred_fallthru
    _
  // Predicated region
  $region18: #{cot_early_tsc_forward.1} parent=0 // pred_check
    _
  $region19: #{cot_early_tsc_forward.1} parent=0 // pred_check_branch
    %550 = sbr.rel (0) target = $region21
  $region20: #{cot_early_tsc_forward.1} parent=0 // pred_region
    _
  $region21: #{cot_early_tsc_forward.1} parent=0 // pred_fallthru
    _

</llo_original>
